<compile_context>
chip_gen: v5e
topology: v5e:2x2
jax: 0.10.0
libtpu: 0.0.40
codegen_flags: <defaults>
</compile_context>

<pallas_src>
import jax
import jax.numpy as jnp
from jax.experimental import pallas as pl
from jax.experimental.pallas import tpu as pltpu


def _decoder_seg_kernel(x_ref, w1t_ref, b1_ref, w2t_ref, b2_ref, o_ref):
    # x_ref  : (C_in, TILE_HW)   f32   channels on sublanes, pixels on lanes
    # w1t_ref: (C_hid, C_in)     f32   (resident, tiny)
    # b1_ref : (C_hid, 1)        f32
    # w2t_ref: (n_cls, C_hid)    f32   (resident, tiny)
    # b2_ref : (n_cls, 1)        f32
    # o_ref  : (n_cls, TILE_HW)  f32   lane-dense output tile
    x = x_ref[...]
    # decoder: 1x1 conv (channel matmul) + bias + ReLU
    h = jnp.dot(w1t_ref[...], x, preferred_element_type=jnp.float32)
    h = jnp.maximum(h + b1_ref[...], 0.0)
    # model (segmentation head): 1x1 conv to class logits
    out = jnp.dot(w2t_ref[...], h, preferred_element_type=jnp.float32)
    o_ref[...] = (out + b2_ref[...]).astype(o_ref.dtype)


def decoder_segmentation_forward(x_nchw, w1, b1, w2, b2, *, tile_hw=8192):
    """x_nchw: (N, C_in, H, W) float32.  Returns logits (N, n_cls, H, W) f32.

    w1: (C_in, C_hid), b1: (C_hid,) or (1, C_hid)
    w2: (C_hid, n_cls), b2: (n_cls,) or (1, n_cls)
    """
    n, c_in, h, w = x_nchw.shape
    c_hid = w1.shape[1]
    n_cls = w2.shape[1]
    hw = h * w

    # Pixel tile: lane-dense (multiple of 128), as big as a modest VMEM budget
    # allows (double-buffered f32 x + out tiles), never over-padding tiny HW.
    vmem_budget = 8 * 1024 * 1024
    bytes_per_pixel_col = 2 * (c_in + n_cls) * 4          # 2x-buffered f32
    cap = max(128, (vmem_budget // bytes_per_pixel_col) // 128 * 128)
    tile_hw = min(tile_hw, cap, pl.cdiv(hw, 128) * 128)
    hw_pad = pl.cdiv(hw, tile_hw) * tile_hw

    # NCHW kept as-is: just merge the spatial dims (free reshape).
    x_flat = x_nchw.reshape(n, c_in, hw)
    if hw_pad != hw:
        x_flat = jnp.pad(x_flat, ((0, 0), (0, 0), (0, hw_pad - hw)))

    # Tiny, VMEM-resident parameters; f32 (all accumulation is f32).
    w1t = jnp.asarray(w1, jnp.float32).T                  # (C_hid, C_in)
    w2t = jnp.asarray(w2, jnp.float32).T                  # (n_cls, C_hid)
    b1c = jnp.asarray(b1, jnp.float32).reshape(c_hid, 1)
    b2c = jnp.asarray(b2, jnp.float32).reshape(n_cls, 1)

    grid = (n, hw_pad // tile_hw)
    flops = 2 * n * hw_pad * (c_in * c_hid + c_hid * n_cls)
    bytes_accessed = (
        n * c_in * hw_pad * 4                 # f32 input read
        + n * n_cls * hw_pad * 4              # f32 logits write
        + (w1t.size + w2t.size + b1c.size + b2c.size) * 4
    )

    out_flat = pl.pallas_call(
        _decoder_seg_kernel,
        out_shape=jax.ShapeDtypeStruct((n, n_cls, hw_pad), jnp.float32),
        grid_spec=pltpu.PrefetchScalarGridSpec(
            num_scalar_prefetch=0,
            grid=grid,
            in_specs=[
                # x tile: (C_in, TILE_HW) — long contiguous DMA rows
                pl.BlockSpec((None, c_in, tile_hw), lambda b, j: (b, 0, j)),
                pl.BlockSpec((c_hid, c_in), lambda b, j: (0, 0)),   # W1^T
                pl.BlockSpec((c_hid, 1), lambda b, j: (0, 0)),      # b1
                pl.BlockSpec((n_cls, c_hid), lambda b, j: (0, 0)),  # W2^T
                pl.BlockSpec((n_cls, 1), lambda b, j: (0, 0)),      # b2
            ],
            # lane-dense output tile (n_cls, TILE_HW)
            out_specs=pl.BlockSpec((None, n_cls, tile_hw), lambda b, j: (b, 0, j)),
        ),
        compiler_params=pltpu.CompilerParams(
            dimension_semantics=("parallel", "parallel"),
        ),
        cost_estimate=pl.CostEstimate(
            flops=flops, transcendentals=0, bytes_accessed=bytes_accessed),
    )(x_flat, w1t, b1c, w2t, b2c)

    if hw_pad != hw:
        out_flat = out_flat[:, :, :hw]
    # Already NCHW: just split the spatial dims back out. No transpose.
    return out_flat.reshape(n, n_cls, h, w)


if __name__ == "__main__":
    key = jax.random.PRNGKey(0)
    k_x, k_w1, k_b1, k_w2, k_b2 = jax.random.split(key, 5)

    # Small shapes consistent with the module's forward.
    N, C_IN, H, W = 2, 4, 16, 16
    C_HID, N_CLS = 16, 8

    x = jax.random.normal(k_x, (N, C_IN, H, W), dtype=jnp.float32)

    # Deterministic synthetic parameters (no checkpoint load).
    w1 = jax.random.normal(k_w1, (C_IN, C_HID), dtype=jnp.float32) * 0.1
    b1 = jax.random.normal(k_b1, (C_HID,), dtype=jnp.float32) * 0.01
    w2 = jax.random.normal(k_w2, (C_HID, N_CLS), dtype=jnp.float32) * 0.1
    b2 = jax.random.normal(k_b2, (N_CLS,), dtype=jnp.float32) * 0.01

    out = decoder_segmentation_forward(x, w1, b1, w2, b2)
    jax.block_until_ready(out)
    assert out.shape == (N, N_CLS, H, W)

    # Reference (plain JAX, same f32 math end to end).
    x_ref = jnp.transpose(x, (0, 2, 3, 1)).reshape(-1, C_IN)
    ref = jnp.maximum(x_ref @ w1 + b1[None, :], 0.0) @ w2 + b2[None, :]
    ref = jnp.transpose(ref.reshape(N, H, W, N_CLS), (0, 3, 1, 2))
    assert jnp.allclose(out, ref, atol=1e-4, rtol=1e-4), (
        float(jnp.max(jnp.abs(out - ref))))

    print("KERNEL_OK")
</pallas_src>

<mosaic_0001>
module attributes {stable_mosaic.version = 11 : i64} {
  func.func @_decoder_seg_kernel(%arg0: i32, %arg1: i32, %arg2: memref<1x4x256xf32, #tpu.memory_space<vmem>>, %arg3: memref<16x4xf32, #tpu.memory_space<vmem>>, %arg4: memref<16x1xf32, #tpu.memory_space<vmem>>, %arg5: memref<8x16xf32, #tpu.memory_space<vmem>>, %arg6: memref<8x1xf32, #tpu.memory_space<vmem>>, %arg7: memref<1x8x256xf32, #tpu.memory_space<vmem>>) attributes {dimension_semantics = [#tpu.dimension_semantics<parallel>, #tpu.dimension_semantics<parallel>], iteration_bounds = array<i64: 2, 1>, scalar_prefetch = 0 : i64, scratch_operands = 0 : i64, tpu.core_type = #tpu.core_type<tc>, window_params = [{transform_indices = @transform_0, window_bounds = array<i64: 1, 4, 256>}, {pipeline_mode = #tpu.pipeline_mode<synchronous>, transform_indices = @transform_1, window_bounds = array<i64: 16, 4>}, {pipeline_mode = #tpu.pipeline_mode<synchronous>, transform_indices = @transform_2, window_bounds = array<i64: 16, 1>}, {pipeline_mode = #tpu.pipeline_mode<synchronous>, transform_indices = @transform_3, window_bounds = array<i64: 8, 16>}, {pipeline_mode = #tpu.pipeline_mode<synchronous>, transform_indices = @transform_4, window_bounds = array<i64: 8, 1>}, {transform_indices = @transform_5, window_bounds = array<i64: 1, 8, 256>}]} {
    %c0 = arith.constant 0 : index
    %c0_0 = arith.constant 0 : index
    %c0_1 = arith.constant 0 : index
    %0 = vector.load %arg2[%c0, %c0_0, %c0_1] : memref<1x4x256xf32, #tpu.memory_space<vmem>>, vector<1x4x256xf32>
    %1 = vector.shape_cast %0 : vector<1x4x256xf32> to vector<4x256xf32>
    %c0_2 = arith.constant 0 : index
    %c0_3 = arith.constant 0 : index
    %2 = vector.load %arg3[%c0_2, %c0_3] : memref<16x4xf32, #tpu.memory_space<vmem>>, vector<16x4xf32>
    %cst = arith.constant dense<0.000000e+00> : vector<16x256xf32>
    %3 = tpu.matmul %2, %1, %cst {dimension_numbers = #tpu.dot_dimension_numbers<[1], [0], [0], [1], [0, 0, 1, 1], [], []>} : vector<16x4xf32>, vector<4x256xf32>, vector<16x256xf32> -> vector<16x256xf32>
    %c0_4 = arith.constant 0 : index
    %c0_5 = arith.constant 0 : index
    %4 = vector.load %arg4[%c0_4, %c0_5] : memref<16x1xf32, #tpu.memory_space<vmem>>, vector<16x1xf32>
    %5 = vector.broadcast %4 : vector<16x1xf32> to vector<16x256xf32>
    %6 = arith.addf %3, %5 : vector<16x256xf32>
    %cst_6 = arith.constant 0.000000e+00 : f32
    %7 = vector.broadcast %cst_6 : f32 to vector<16x256xf32>
    %8 = arith.maximumf %6, %7 : vector<16x256xf32>
    %c0_7 = arith.constant 0 : index
    %c0_8 = arith.constant 0 : index
    %9 = vector.load %arg5[%c0_7, %c0_8] : memref<8x16xf32, #tpu.memory_space<vmem>>, vector<8x16xf32>
    %cst_9 = arith.constant dense<0.000000e+00> : vector<8x256xf32>
    %10 = tpu.matmul %9, %8, %cst_9 {dimension_numbers = #tpu.dot_dimension_numbers<[1], [0], [0], [1], [0, 0, 1, 1], [], []>} : vector<8x16xf32>, vector<16x256xf32>, vector<8x256xf32> -> vector<8x256xf32>
    %c0_10 = arith.constant 0 : index
    %c0_11 = arith.constant 0 : index
    %11 = vector.load %arg6[%c0_10, %c0_11] : memref<8x1xf32, #tpu.memory_space<vmem>>, vector<8x1xf32>
    %12 = vector.broadcast %11 : vector<8x1xf32> to vector<8x256xf32>
    %13 = arith.addf %10, %12 : vector<8x256xf32>
    %c0_12 = arith.constant 0 : index
    %c0_13 = arith.constant 0 : index
    %c0_14 = arith.constant 0 : index
    %14 = vector.load %arg7[%c0_12, %c0_13, %c0_14] : memref<1x8x256xf32, #tpu.memory_space<vmem>>, vector<1x8x256xf32>
    %15 = vector.shape_cast %14 : vector<1x8x256xf32> to vector<8x256xf32>
    %16 = vector.shape_cast %13 : vector<8x256xf32> to vector<1x8x256xf32>
    tpu.vector_store %arg7[%c0_12, %c0_13, %c0_14], %16 {strides = array<i32>} : memref<1x8x256xf32, #tpu.memory_space<vmem>>, vector<1x8x256xf32>,
    return
  }
  func.func @transform_0(%arg0: i32, %arg1: i32) -> (i32, i32, i32) {
    %c0_i32 = arith.constant 0 : i32
    %c0_i32_0 = arith.constant 0 : i32
    return %arg0, %c0_i32, %arg1 : i32, i32, i32
  }
  func.func @transform_1(%arg0: i32, %arg1: i32) -> (i32, i32) {
    %c0_i32 = arith.constant 0 : i32
    %c0_i32_0 = arith.constant 0 : i32
    %c0_i32_1 = arith.constant 0 : i32
    return %c0_i32, %c0_i32_0 : i32, i32
  }
  func.func @transform_2(%arg0: i32, %arg1: i32) -> (i32, i32) {
    %c0_i32 = arith.constant 0 : i32
    %c0_i32_0 = arith.constant 0 : i32
    %c0_i32_1 = arith.constant 0 : i32
    return %c0_i32, %c0_i32_0 : i32, i32
  }
  func.func @transform_3(%arg0: i32, %arg1: i32) -> (i32, i32) {
    %c0_i32 = arith.constant 0 : i32
    %c0_i32_0 = arith.constant 0 : i32
    %c0_i32_1 = arith.constant 0 : i32
    return %c0_i32, %c0_i32_0 : i32, i32
  }
  func.func @transform_4(%arg0: i32, %arg1: i32) -> (i32, i32) {
    %c0_i32 = arith.constant 0 : i32
    %c0_i32_0 = arith.constant 0 : i32
    %c0_i32_1 = arith.constant 0 : i32
    return %c0_i32, %c0_i32_0 : i32, i32
  }
  func.func @transform_5(%arg0: i32, %arg1: i32) -> (i32, i32, i32) {
    %c0_i32 = arith.constant 0 : i32
    %c0_i32_0 = arith.constant 0 : i32
    return %arg0, %c0_i32, %arg1 : i32, i32, i32
  }
}

</mosaic_0001>

<llo_original>
// kernel: tpu_custom_call.1
$region0: #{tpu_custom_call.1}
  #allocation0 [shape = 'u32[]', space=smem, size = 0x4, offset = 0x4, fixed_abs, tag = 'smem constant byte address 0x4 - core index']
  #allocation1 [shape = 'u32[72,128]{1,0:T(1,128)}', space=vmem, size = 0x9000, scoped, tag = 'internal scratch']
  %s0 = inlined_call_operand.vmem [shape: f32[2,4,256], index: 0, kind: input, shape index: {}]
  %s1 = inlined_call_operand.vmem [shape: f32[16,4], index: 1, kind: input, shape index: {}]
  %s2 = inlined_call_operand.vmem [shape: f32[16,1], index: 2, kind: input, shape index: {}]
  %s3 = inlined_call_operand.vmem [shape: f32[8,16], index: 3, kind: input, shape index: {}]
  %s4 = inlined_call_operand.vmem [shape: f32[8,1], index: 4, kind: input, shape index: {}]
  %s5 = inlined_call_operand.hbm [shape: f32[2,8,256], index: 5, kind: output, shape index: {}]
  %s6 = sld [smem:[#allocation0]]
  $region53: #{tpu_custom_call.1} parent=0
    _
  %s8 = ssub.s32 1, %s6
  %s9 = scalar_select 0, %s8, %s6
  $region1: #{tpu_custom_call.1} parent=0
    #allocation2 [shape = 'u8[16384]{0}', space=vmem, size = 0x4000, scoped, tag = 'output window, operand 0']
    #allocation3 [shape = 's32[2]{0}', space=sflag, size = 0x8, scoped, tag = 'scoped memory for tpu_custom_call.1']
    %10 = vsyncpa [#allocation3], 0
    %s11 = scalar_lea.sflag [#allocation3], 1
    %12 = vsyncpa %s11, 0
    loop: start=0, step=1, limit=4
    $region2: #{tpu_custom_call.1} parent=1 // loop_pre_header
      _
    $region3: #{tpu_custom_call.1} parent=1 // loop_header
      %s14 = sphi 0, %s18
      %p15 = scmp.ge.s32.totalorder %s14, 4
      %s21 = sphi 0, %s33
      %s22 = sphi 0, %s29
      %s23 = sphi 0, %s21
      %s24 = sphi 0, %s22
      %s25 = sphi 0, %s23
      %s26 = sphi 0, %s24
      %s38 = sphi 0, %s40
      %s41 = sphi 0, %s38
      %s42 = sphi 0, %s41
      %s58 = sphi 0, %s42
      %s62 = sphi 0, %s62
      %s64 = sphi 0, %s62
      %s65 = sphi 0, %s64
      %s79 = sphi 0, %s65
      %s83 = sphi 0, %s83
      %s85 = sphi 0, %s83
      %s86 = sphi 0, %s85
      %s100 = sphi 0, %s86
      %s104 = sphi 0, %s104
      %s106 = sphi 0, %s104
      %s107 = sphi 0, %s106
      %s121 = sphi 0, %s107
      %s125 = sphi 0, %s125
      %s127 = sphi 0, %s125
      %s128 = sphi 0, %s127
      %s142 = sphi 0, %s128
      %s150 = sphi 0, %s152
      %s153 = sphi 0, %s150
      %s154 = sphi 0, %s153
      %s170 = sphi 0, %s154
    $region4: #{tpu_custom_call.1} parent=1 // loop_header_branch
      %17 = sbr.rel (%p15) target = $region8
    $region5: #{tpu_custom_call.1} parent=1 // loop_body
      %s19 = ssub.s32 %s14, 1
      %s20 = ssub.s32 %s14, 2
      %s27 = sadd.s32 1, %s22
      %p28 = scmp.ge.s32.totalorder %s27, 1
      %s29 = scalar_select %p28, 0, %s27
      %s30 = sadd.s32 1, %s21
      %s31 = scalar_select %p28, %s30, %s21
      %p32 = scmp.ge.s32.totalorder %s31, 2
      %s33 = scalar_select %p32, 0, %s31
      %s34 = ssub.s32 %s21, %s33
      %s35 = ssub.s32 %s22, %s29
      %s36 = sor.u32 %s34, %s35
      %p37 = scmp.eq.s32.totalorder %s36, 0
      %s39 = sadd.s32 %s38, 1
      %s40 = scalar_select %p37, %s38, %s39
      %p43 = pneg %p37
      %p44 = scmp.eq.s32.totalorder %s14, 1
      %p45 = por %p43, %p44
      %p46 = scmp.ne.s32.totalorder %s38, %s41
      %p47 = scmp.eq.s32.totalorder %s14, 0
      %p48 = por %p46, %p47
      %p49 = scmp.ne.s32.totalorder %s38, %s41
      %p50 = scmp.eq.s32.totalorder %s19, 1
      %p51 = por %p49, %p50
      %p52 = scmp.ne.s32.totalorder %s41, %s42
      %p53 = scmp.eq.s32.totalorder %s19, 0
      %p54 = por %p52, %p53
      %p55 = scmp.ne.s32.totalorder %s41, %s42
      %p56 = scmp.eq.s32.totalorder %s20, 1
      %p57 = por %p55, %p56
      %p59 = scmp.ne.s32.totalorder %s42, %s58
      %p60 = scmp.eq.s32.totalorder %s20, 0
      %p61 = por %p59, %p60
      %s63 = sadd.s32 %s62, 1
      %p66 = scmp.eq.s32.totalorder %s14, 1
      %p67 = scmp.ne.s32.totalorder %s62, %s64
      %p68 = scmp.eq.s32.totalorder %s14, 0
      %p69 = por %p67, %p68
      %p70 = scmp.ne.s32.totalorder %s62, %s64
      %p71 = scmp.eq.s32.totalorder %s19, 1
      %p72 = por %p70, %p71
      %p73 = scmp.ne.s32.totalorder %s64, %s65
      %p74 = scmp.eq.s32.totalorder %s19, 0
      %p75 = por %p73, %p74
      %p76 = scmp.ne.s32.totalorder %s64, %s65
      %p77 = scmp.eq.s32.totalorder %s20, 1
      %p78 = por %p76, %p77
      %p80 = scmp.ne.s32.totalorder %s65, %s79
      %p81 = scmp.eq.s32.totalorder %s20, 0
      %p82 = por %p80, %p81
      %s84 = sadd.s32 %s83, 1
      %p87 = scmp.eq.s32.totalorder %s14, 1
      %p88 = scmp.ne.s32.totalorder %s83, %s85
      %p89 = scmp.eq.s32.totalorder %s14, 0
      %p90 = por %p88, %p89
      %p91 = scmp.ne.s32.totalorder %s83, %s85
      %p92 = scmp.eq.s32.totalorder %s19, 1
      %p93 = por %p91, %p92
      %p94 = scmp.ne.s32.totalorder %s85, %s86
      %p95 = scmp.eq.s32.totalorder %s19, 0
      %p96 = por %p94, %p95
      %p97 = scmp.ne.s32.totalorder %s85, %s86
      %p98 = scmp.eq.s32.totalorder %s20, 1
      %p99 = por %p97, %p98
      %p101 = scmp.ne.s32.totalorder %s86, %s100
      %p102 = scmp.eq.s32.totalorder %s20, 0
      %p103 = por %p101, %p102
      %s105 = sadd.s32 %s104, 1
      %p108 = scmp.eq.s32.totalorder %s14, 1
      %p109 = scmp.ne.s32.totalorder %s104, %s106
      %p110 = scmp.eq.s32.totalorder %s14, 0
      %p111 = por %p109, %p110
      %p112 = scmp.ne.s32.totalorder %s104, %s106
      %p113 = scmp.eq.s32.totalorder %s19, 1
      %p114 = por %p112, %p113
      %p115 = scmp.ne.s32.totalorder %s106, %s107
      %p116 = scmp.eq.s32.totalorder %s19, 0
      %p117 = por %p115, %p116
      %p118 = scmp.ne.s32.totalorder %s106, %s107
      %p119 = scmp.eq.s32.totalorder %s20, 1
      %p120 = por %p118, %p119
      %p122 = scmp.ne.s32.totalorder %s107, %s121
      %p123 = scmp.eq.s32.totalorder %s20, 0
      %p124 = por %p122, %p123
      %s126 = sadd.s32 %s125, 1
      %p129 = scmp.eq.s32.totalorder %s14, 1
      %p130 = scmp.ne.s32.totalorder %s125, %s127
      %p131 = scmp.eq.s32.totalorder %s14, 0
      %p132 = por %p130, %p131
      %p133 = scmp.ne.s32.totalorder %s125, %s127
      %p134 = scmp.eq.s32.totalorder %s19, 1
      %p135 = por %p133, %p134
      %p136 = scmp.ne.s32.totalorder %s127, %s128
      %p137 = scmp.eq.s32.totalorder %s19, 0
      %p138 = por %p136, %p137
      %p139 = scmp.ne.s32.totalorder %s127, %s128
      %p140 = scmp.eq.s32.totalorder %s20, 1
      %p141 = por %p139, %p140
      %p143 = scmp.ne.s32.totalorder %s128, %s142
      %p144 = scmp.eq.s32.totalorder %s20, 0
      %p145 = por %p143, %p144
      %s146 = ssub.s32 %s21, %s33
      %s147 = ssub.s32 %s22, %s29
      %s148 = sor.u32 %s146, %s147
      %p149 = scmp.eq.s32.totalorder %s148, 0
      %s151 = sadd.s32 %s150, 1
      %s152 = scalar_select %p149, %s150, %s151
      %p155 = pneg %p149
      %p156 = scmp.eq.s32.totalorder %s14, 1
      %p157 = por %p155, %p156
      %p158 = scmp.ne.s32.totalorder %s150, %s153
      %p159 = scmp.eq.s32.totalorder %s14, 0
      %p160 = por %p158, %p159
      %p161 = scmp.ne.s32.totalorder %s150, %s153
      %p162 = scmp.eq.s32.totalorder %s19, 1
      %p163 = por %p161, %p162
      %p164 = scmp.ne.s32.totalorder %s153, %s154
      %p165 = scmp.eq.s32.totalorder %s19, 0
      %p166 = por %p164, %p165
      %p167 = scmp.ne.s32.totalorder %s153, %s154
      %p168 = scmp.eq.s32.totalorder %s20, 1
      %p169 = por %p167, %p168
      %p171 = scmp.ne.s32.totalorder %s154, %s170
      %p172 = scmp.eq.s32.totalorder %s20, 0
      %p173 = por %p171, %p172
      %p174 = scmp.le.s32.totalorder 1, %s14
      %p175 = scmp.lt.s32.totalorder %s14, 3
      %p176 = pnand %p174, %p175
      %p177 = pneg %p176
      // Predicated region
      $region9: #{tpu_custom_call.1} parent=5 // pred_check
        _
      $region10: #{tpu_custom_call.1} parent=5 // pred_check_branch
        %179 = sbr.rel (%p176) target = $region12
      $region11: #{tpu_custom_call.1} parent=5 // pred_region
        %s180 = ssub.s32 %s14, 1
        // Predicated region
        $region13: #{tpu_custom_call.1} parent=11 // pred_check
          %p181 = pneg %p75
        $region14: #{tpu_custom_call.1} parent=11 // pred_check_branch
          %183 = sbr.rel (%p181) target = $region16
        $region15: #{tpu_custom_call.1} parent=11 // pred_region
          _
        $region16: #{tpu_custom_call.1} parent=11 // pred_fallthru
          _
        // Predicated region
        $region17: #{tpu_custom_call.1} parent=11 // pred_check
          %p184 = pneg %p96
        $region18: #{tpu_custom_call.1} parent=11 // pred_check_branch
          %186 = sbr.rel (%p184) target = $region20
        $region19: #{tpu_custom_call.1} parent=11 // pred_region
          _
        $region20: #{tpu_custom_call.1} parent=11 // pred_fallthru
          _
        // Predicated region
        $region21: #{tpu_custom_call.1} parent=11 // pred_check
          %p187 = pneg %p117
        $region22: #{tpu_custom_call.1} parent=11 // pred_check_branch
          %189 = sbr.rel (%p187) target = $region24
        $region23: #{tpu_custom_call.1} parent=11 // pred_region
          _
        $region24: #{tpu_custom_call.1} parent=11 // pred_fallthru
          _
        // Predicated region
        $region25: #{tpu_custom_call.1} parent=11 // pred_check
          %p190 = pneg %p138
        $region26: #{tpu_custom_call.1} parent=11 // pred_check_branch
          %192 = sbr.rel (%p190) target = $region28
        $region27: #{tpu_custom_call.1} parent=11 // pred_region
          _
        $region28: #{tpu_custom_call.1} parent=11 // pred_fallthru
          _
      $region12: #{tpu_custom_call.1} parent=5 // pred_fallthru
        _
      %p193 = scmp.lt.s32.totalorder %s14, 2
      // Predicated region
      $region29: #{tpu_custom_call.1} parent=5 // pred_check
        %p194 = pneg %p193
      $region30: #{tpu_custom_call.1} parent=5 // pred_check_branch
        %196 = sbr.rel (%p194) target = $region32
      $region31: #{tpu_custom_call.1} parent=5 // pred_region
        // Predicated region
        $region33: #{tpu_custom_call.1} parent=31 // pred_check
          %p197 = pneg %p48
        $region34: #{tpu_custom_call.1} parent=31 // pred_check_branch
          %199 = sbr.rel (%p197) target = $region36
        $region35: #{tpu_custom_call.1} parent=31 // pred_region
          %s200 = smul.u32 2, %s22
          %p201 = scmp.lt.s32.totalorder %s21, 1
          %s202 = scalar_select %p201, %s21, 1
          %p203 = scmp.lt.s32.totalorder %s200, 1
          %s204 = scalar_select %p203, %s200, 1
          %s205 = smul.addr %s202, 2
          %s206 = sadd.s32 %s204, %s205
          %s207 = smul.addr %s206, 4
          %s208 = scalar_lea.vmem %s0, %s207
          %s209 = smul.u32 2, %s22
        $region36: #{tpu_custom_call.1} parent=31 // pred_fallthru
          _
      $region32: #{tpu_custom_call.1} parent=5 // pred_fallthru
        _
      %p210 = scmp.le.s32.totalorder 1, %s14
      %p211 = scmp.lt.s32.totalorder %s14, 3
      %p212 = pnand %p210, %p211
      %p213 = pneg %p212
      // Predicated region
      $region37: #{tpu_custom_call.1} parent=5 // pred_check
        _
      $region38: #{tpu_custom_call.1} parent=5 // pred_check_branch
        %215 = sbr.rel (%p212) target = $region40
      $region39: #{tpu_custom_call.1} parent=5 // pred_region
        %s216 = ssub.s32 %s14, 1
        %s217 = smul.u32 2, %s24
        %p218 = scmp.lt.s32.totalorder %s23, 1
        %s219 = scalar_select %p218, %s23, 1
        %p220 = scmp.lt.s32.totalorder %s217, 1
        %s221 = scalar_select %p220, %s217, 1
        %s222 = smul.addr %s219, 2
        %s223 = sadd.s32 %s221, %s222
        %s224 = smul.addr %s223, 4
        %s225 = scalar_lea.vmem %s0, %s224
        %p226 = pneg %p54
        %p227 = pneg %p51
        %p228 = pneg %p75
        %p229 = pneg %p72
        %p230 = pneg %p96
        %p231 = pneg %p93
        %p232 = pneg %p117
        %p233 = pneg %p114
        %p234 = pneg %p138
        %p235 = pneg %p135
        %p236 = pneg %p166
        %p237 = pneg %p163
        %s238 = sand.u32 %s153, 1
        %s239 = scalar_lea.sflag [#allocation3], %s238
        %s240 = sand.u32 %s153, 1
        %s241 = smul.addr %s240, 16
        %s242 = scalar_lea.vmem [#allocation2], %s241
        %s243 = smul.u32 2, %s24
        %p244 = scmp.lt.s32.totalorder %s23, 1
        %s245 = scalar_select %p244, %s23, 1
        %p246 = scmp.lt.s32.totalorder %s243, 1
        %s247 = scalar_select %p246, %s243, 1
        %s248 = smul.addr %s245, 2
        %s249 = sadd.s32 %s247, %s248
        %s250 = smul.addr %s249, 4
        %s251 = scalar_lea.vmem %s0, %s250
        %s252 = smul.u32 2, %s24
        %s253 = smul.u32 2, %s24
        %v254 = vld [vmem:[%s251] sm:$0xff]
        %v255 = vld [vmem:[%s1] sm:$0xff]
        %v256 = vld [vmem:[%s1 + $0x8] sm:$0xff]
        %v257 = vld [vmem:[%s2] sm:$0xff]
        %v258 = vld [vmem:[%s2 + $0x8] sm:$0xff]
        %260 = vset.pattern.permute.xlu0 0
        %261 = vperm.xlu0 %260, %v257
        %v262 = vpop.permute.xlu0 %261
        %265 = vset.pattern.permute.xlu0 0
        %266 = vperm.xlu0 %265, %v258
        %v267 = vpop.permute.xlu0 %266
        %270 = vst [vmem:[#allocation1] ss:$2 sm:$0xff] %v254
        %v271 = vld.sshfl [vmem:[#allocation1] sm:$0xff pattern:$0x75316420]
        %v272 = vld.sshfl [vmem:[#allocation1 + $0x8] sm:$0xff pattern:$0x75316420]
        %vm273 = vcmask 31744
        %v275 = vsel %vm273, %v255, 0
        %v278 = vsel %vm273, %v256, 0
        %vm280 = vcmask 1043456
        %v281 = vsel %vm280, %v271, 0
        %v283 = vsel %vm280, %v272, 0
        %285 = vmatpush.msra.mxu0 0.0
        %286 = vmatpush.msra.mxu0 0.0
        %287 = vmatpush.msra.mxu0 0.0
        %288 = vmatpush.msra.mxu0 0.0
        %289 = vmatpush.msra.mxu0 0.0
        %290 = vmatpush.msra.mxu0 0.0
        %291 = vmatpush.msra.mxu0 0.0
        %292 = vmatpush.msra.mxu0 0.0
        %293 = vmatpush.msra.mxu0 0.0
        %294 = vmatpush.msra.mxu0 0.0
        %295 = vmatpush.msra.mxu0 0.0
        %296 = vmatpush.msra.mxu0 0.0
        %297 = vmatpush.msra.mxu0 0.0
        %298 = vmatpush.msra.mxu0 0.0
        %299 = vmatpush.msra.mxu0 0.0
        %300 = vmatpush.msra.mxu0 %v281
        %301 = vmatmul.f32.gmra.mxu0 %v275
        %v302 = vpop.f32.mrf.mxu0
        %v303 = vadd.f32 %v262, %v302
        %304 = vmatmul.f32.gmra.mxu0 %v278
        %v305 = vpop.f32.mrf.mxu0
        %v306 = vadd.f32 %v267, %v305
        %307 = vdwg.mxu0
        %308 = vmatpush.msra.mxu0 0.0
        %309 = vmatpush.msra.mxu0 0.0
        %310 = vmatpush.msra.mxu0 0.0
        %311 = vmatpush.msra.mxu0 0.0
        %312 = vmatpush.msra.mxu0 0.0
        %313 = vmatpush.msra.mxu0 0.0
        %314 = vmatpush.msra.mxu0 0.0
        %315 = vmatpush.msra.mxu0 0.0
        %316 = vmatpush.msra.mxu0 0.0
        %317 = vmatpush.msra.mxu0 0.0
        %318 = vmatpush.msra.mxu0 0.0
        %319 = vmatpush.msra.mxu0 0.0
        %320 = vmatpush.msra.mxu0 0.0
        %321 = vmatpush.msra.mxu0 0.0
        %322 = vmatpush.msra.mxu0 0.0
        %323 = vmatpush.msra.mxu0 %v283
        %324 = vmatmul.f32.gmra.mxu0 %v275
        %v325 = vpop.f32.mrf.mxu0
        %v326 = vadd.f32 %v262, %v325
        %327 = vmatmul.f32.gmra.mxu0 %v278
        %v328 = vpop.f32.mrf.mxu0
        %v329 = vadd.f32 %v267, %v328
        %330 = vdwg.mxu0
        %v331 = vmax.f32 %v303, 0.0
        %v332 = vmax.f32 %v326, 0.0
        %v333 = vmax.f32 %v306, 0.0
        %v334 = vmax.f32 %v329, 0.0
        %v335 = vld [vmem:[%s3] sm:$0xff]
        %v336 = vld [vmem:[%s4] sm:$0xff]
        %338 = vset.pattern.permute.xlu0 0
        %339 = vperm.xlu0 %338, %v336
        %v340 = vpop.permute.xlu0 %339
        %vm342 = vcmask 130048
        %v344 = vsel %vm342, %v335, 0
        %346 = vmatpush.msra.mxu0 0.0
        %347 = vmatpush.msra.mxu0 0.0
        %348 = vmatpush.msra.mxu0 0.0
        %349 = vmatpush.msra.mxu0 0.0
        %350 = vmatpush.msra.mxu0 0.0
        %351 = vmatpush.msra.mxu0 0.0
        %352 = vmatpush.msra.mxu0 0.0
        %353 = vmatpush.msra.mxu0 0.0
        %354 = vmatpush.msra.mxu0 0.0
        %355 = vmatpush.msra.mxu0 0.0
        %356 = vmatpush.msra.mxu0 0.0
        %357 = vmatpush.msra.mxu0 0.0
        %358 = vmatpush.msra.mxu0 0.0
        %359 = vmatpush.msra.mxu0 0.0
        %360 = vmatpush.msra.mxu0 %v333
        %361 = vmatpush.msra.mxu0 %v331
        %362 = vmatmul.f32.gmra.mxu0 %v344
        %v363 = vpop.f32.mrf.mxu0
        %v364 = vadd.f32 %v340, %v363
        %365 = vdwg.mxu0
        %366 = vmatpush.msra.mxu0 0.0
        %367 = vmatpush.msra.mxu0 0.0
        %368 = vmatpush.msra.mxu0 0.0
        %369 = vmatpush.msra.mxu0 0.0
        %370 = vmatpush.msra.mxu0 0.0
        %371 = vmatpush.msra.mxu0 0.0
        %372 = vmatpush.msra.mxu0 0.0
        %373 = vmatpush.msra.mxu0 0.0
        %374 = vmatpush.msra.mxu0 0.0
        %375 = vmatpush.msra.mxu0 0.0
        %376 = vmatpush.msra.mxu0 0.0
        %377 = vmatpush.msra.mxu0 0.0
        %378 = vmatpush.msra.mxu0 0.0
        %379 = vmatpush.msra.mxu0 0.0
        %380 = vmatpush.msra.mxu0 %v334
        %381 = vmatpush.msra.mxu0 %v332
        %382 = vmatmul.f32.gmra.mxu0 %v344
        %v383 = vpop.f32.mrf.mxu0
        %v384 = vadd.f32 %v340, %v383
        %385 = vdwg.mxu0
        %386 = vst [vmem:[%s242] sm:$0xff] %v364
        %387 = vst [vmem:[%s242 + $0x8] sm:$0xff] %v384
        %s388 = sand.u32 %s153, 1
        %s389 = scalar_lea.sflag [#allocation3], %s388
        %s390 = sand.u32 %s153, 1
        %s391 = smul.addr %s390, 16
        %s392 = scalar_lea.vmem [#allocation2], %s391
        // Predicated region
        $region41: #{tpu_custom_call.1} parent=39 // pred_check
          %p393 = pneg %p163
        $region42: #{tpu_custom_call.1} parent=39 // pred_check_branch
          %395 = sbr.rel (%p393) target = $region44
        $region43: #{tpu_custom_call.1} parent=39 // pred_region
          %s396 = smul.u32 2, %s24
          %398 = vsyncadd %s389, 0
          %s399 = smul.addr %s23, 2
          %s400 = sadd.s32 %s396, %s399
          %s401 = smul.addr %s400, 8
          %s402 = scalar_lea.hbm %s5, %s401
          %s404 = sshll.u32 %s392, 4
          %s405 = int_to_ptr.vmem [resolvable:$true] %s404
          %s406 = sshll.u32 %s402, 4
          %s407 = int_to_ptr.hbm [resolvable:$true] %s406
          %409 = dma.vmem_to_hbm [thread:$0]  %s405, 256, %s407, %s389
        $region44: #{tpu_custom_call.1} parent=39 // pred_fallthru
          _
      $region40: #{tpu_custom_call.1} parent=5 // pred_fallthru
        _
      %p410 = scmp.le.s32.totalorder 2, %s14
      // Predicated region
      $region45: #{tpu_custom_call.1} parent=5 // pred_check
        %p411 = pneg %p410
      $region46: #{tpu_custom_call.1} parent=5 // pred_check_branch
        %413 = sbr.rel (%p411) target = $region48
      $region47: #{tpu_custom_call.1} parent=5 // pred_region
        %s414 = ssub.s32 %s14, 2
        // Predicated region
        $region49: #{tpu_custom_call.1} parent=47 // pred_check
          %p415 = pneg %p169
        $region50: #{tpu_custom_call.1} parent=47 // pred_check_branch
          %417 = sbr.rel (%p415) target = $region52
        $region51: #{tpu_custom_call.1} parent=47 // pred_region
          %s418 = sand.u32 %s154, 1
          %s419 = scalar_lea.sflag [#allocation3], %s418
          %s420 = sand.u32 %s154, 1
          %s421 = smul.addr %s420, 16
          %s422 = scalar_lea.vmem [#allocation2], %s421
          %424 = dma.done %s419, 256
        $region52: #{tpu_custom_call.1} parent=47 // pred_fallthru
          _
      $region48: #{tpu_custom_call.1} parent=5 // pred_fallthru
        _
    $region6: #{tpu_custom_call.1} parent=1 // loop_footer
      %s18 = sadd.s32 1, %s14
    $region7: #{tpu_custom_call.1} parent=1 // loop_footer_branch
      %13 = sbr.rel target = $region3
    $region8: #{tpu_custom_call.1} parent=1 // loop_exit
      _
    %425 = vsyncpa [#allocation3], 1
    %s426 = scalar_lea.sflag [#allocation3], 1
    %427 = vsyncpa %s426, 1

</llo_original>
